<compile_context>
chip_gen: v7x
topology: tpu7x:2x2x1
jax: 0.10.0
libtpu: 0.0.40
codegen_flags: <defaults>
</compile_context>

<pallas_src>
import numpy as np
import jax
import jax.numpy as jnp
from jax import lax
from jax.experimental import pallas as pl
from jax.experimental.pallas import tpu as pltpu


# -----------------------------------------------------------------------------
# Pallas kernel
# -----------------------------------------------------------------------------
def _make_lstm_kernel(T, H):
    H3 = 3 * H

    def kernel(x_ref, wih_ref, whh_ref, b_ref, wfc_ref, bfc_ref, out_ref):
        # ---- Hoisted (non-recurrent) input path: one matmul for all T steps,
        # fused bias (b_ih + b_hh) added once.  (T, 4H) f32 stays in registers.
        xg = (jnp.dot(x_ref[...], wih_ref[...],
                      preferred_element_type=jnp.float32)
              + b_ref[...])                                   # (T, 4H)

        # Load the recurrent weight once, outside the serial loop.
        whh = whh_ref[...]                                    # (H, 4H)

        h = jnp.zeros((1, H), jnp.float32)
        c = jnp.zeros((1, H), jnp.float32)
        hs = []
        # T is small and static: full unroll with static slice indices keeps
        # the per-step chain to one (1,H)x(H,4H) matmul + pointwise gate math.
        for t in range(T):
            gates = xg[t:t + 1, :] + jnp.dot(
                h, whh, preferred_element_type=jnp.float32)   # (1, 4H)
            # Gate columns were permuted host-side to (i, f, o, g):
            # one contiguous sigmoid over 3H lanes, one tanh over H lanes.
            sig = jax.nn.sigmoid(gates[:, :H3])
            i = sig[:, 0:H]
            f = sig[:, H:2 * H]
            o = sig[:, 2 * H:H3]
            g = jnp.tanh(gates[:, H3:])
            c = f * c + i * g
            h = o * jnp.tanh(c)
            hs.append(h)

        hs_all = jnp.concatenate(hs, axis=0)                  # (T, H)

        # ---- FC head fused over all timesteps; lane-dense (T, 128) store.
        out_ref[...] = (jnp.dot(hs_all, wfc_ref[...],
                                preferred_element_type=jnp.float32)
                        + bfc_ref[...])

    return kernel


# -----------------------------------------------------------------------------
# Wrapper
# -----------------------------------------------------------------------------
def lstm_model_forward(x, params):
    """x: (T, B=1, input_dim) [batch_first=False]; returns (T, output_dim)."""
    T, B, D = x.shape
    assert B == 1, "LSTMModel.forward hard-codes h0/c0 to batch == 1"
    H = params["w_hh"].shape[1]
    O = params["w_fc"].shape[0]
    O_PAD = 128  # lane-dense output slab width

    # Host-side weight prep:
    #  * PyTorch gate row order is (i, f, g, o); permute rows to (i, f, o, g)
    #    so the kernel sigmoids one contiguous 3H-lane slice and tanhs the rest.
    perm = np.concatenate([np.arange(0, H), np.arange(H, 2 * H),
                           np.arange(3 * H, 4 * H), np.arange(2 * H, 3 * H)])
    x_k   = x[:, 0, :].astype(jnp.float32)                        # (T, D)
    wih_t = params["w_ih"][perm].T.astype(jnp.float32)            # (D, 4H)
    whh_t = params["w_hh"][perm].T.astype(jnp.float32)            # (H, 4H)
    b     = (params["b_ih"] + params["b_hh"])[perm].reshape(1, 4 * H).astype(jnp.float32)
    #  * Zero-pad the FC head to 128 output lanes -> unmasked lane-dense store.
    wfc_pad = jnp.zeros((H, O_PAD), jnp.float32).at[:, :O].set(
        params["w_fc"].T.astype(jnp.float32))                     # (H, 128)
    bfc_pad = jnp.zeros((1, O_PAD), jnp.float32).at[:, :O].set(
        params["b_fc"].astype(jnp.float32))                       # (1, 128)

    kernel = _make_lstm_kernel(T, H)
    vmem = lambda: pl.BlockSpec(memory_space=pltpu.MemorySpace.VMEM)

    out_pad = pl.pallas_call(
        kernel,
        out_shape=jax.ShapeDtypeStruct((T, O_PAD), jnp.float32),
        in_specs=[vmem() for _ in range(6)],
        out_specs=vmem(),
    )(x_k, wih_t, whh_t, b, wfc_pad, bfc_pad)

    return out_pad[:, :O]


# -----------------------------------------------------------------------------
# Pure-JAX reference (mirrors the PyTorch forward, for correctness check)
# -----------------------------------------------------------------------------
def ref_forward(x, params):
    T, B, D = x.shape
    H = params["w_hh"].shape[1]
    hp = lax.Precision.HIGHEST

    h = jnp.zeros((H,), jnp.float32)
    c = jnp.zeros((H,), jnp.float32)
    hs = []
    for t in range(T):
        gates = (jnp.dot(x[t, 0], params["w_ih"].T, precision=hp) + params["b_ih"]
                 + jnp.dot(h, params["w_hh"].T, precision=hp) + params["b_hh"])
        i = jax.nn.sigmoid(gates[0 * H:1 * H])
        f = jax.nn.sigmoid(gates[1 * H:2 * H])
        g = jnp.tanh(gates[2 * H:3 * H])
        o = jax.nn.sigmoid(gates[3 * H:4 * H])
        c = f * c + i * g
        h = o * jnp.tanh(c)
        hs.append(h)
    hs = jnp.stack(hs)                              # out[:, -1, :] with batch==1
    return jnp.dot(hs, params["w_fc"].T, precision=hp) + params["b_fc"]


# -----------------------------------------------------------------------------
if __name__ == "__main__":
    # Small shapes consistent with the module: batch=1 (required by h0 shape),
    # layer_dim=1 (required by h0 shape), seq=8, input_dim=16, hidden=32, out=8.
    INPUT_DIM, HIDDEN_DIM, LAYER_DIM, OUTPUT_DIM = 16, 32, 1, 8
    T, B = 8, 1

    key = jax.random.PRNGKey(0)
    ks = jax.random.split(key, 7)

    def rnd(k, shape, scale=0.1):
        return (scale * jax.random.normal(k, shape)).astype(jnp.float32)

    params = {
        "w_ih": rnd(ks[0], (4 * HIDDEN_DIM, INPUT_DIM)),
        "w_hh": rnd(ks[1], (4 * HIDDEN_DIM, HIDDEN_DIM)),
        "b_ih": rnd(ks[2], (4 * HIDDEN_DIM,)),
        "b_hh": rnd(ks[3], (4 * HIDDEN_DIM,)),
        "w_fc": rnd(ks[4], (OUTPUT_DIM, HIDDEN_DIM)),
        "b_fc": rnd(ks[5], (OUTPUT_DIM,)),
    }
    x = jax.random.normal(ks[6], (T, B, INPUT_DIM), dtype=jnp.float32)

    out = jax.block_until_ready(lstm_model_forward(x, params))
    ref = jax.block_until_ready(ref_forward(x, params))

    np.testing.assert_allclose(np.asarray(out), np.asarray(ref),
                               rtol=2e-3, atol=2e-3)
    assert out.shape == (T, OUTPUT_DIM)

    print("KERNEL_OK")
</pallas_src>

<mosaic_0001>
module attributes {stable_mosaic.version = 11 : i64} {
  func.func @kernel(%arg0: memref<8x16xf32, #tpu.memory_space<vmem>>, %arg1: memref<16x128xf32, #tpu.memory_space<vmem>>, %arg2: memref<32x128xf32, #tpu.memory_space<vmem>>, %arg3: memref<1x128xf32, #tpu.memory_space<vmem>>, %arg4: memref<32x128xf32, #tpu.memory_space<vmem>>, %arg5: memref<1x128xf32, #tpu.memory_space<vmem>>, %arg6: memref<8x128xf32, #tpu.memory_space<vmem>>) attributes {dimension_semantics = [], scalar_prefetch = 0 : i64, scratch_operands = 0 : i64, tpu.core_type = #tpu.core_type<tc>} {
    %c0 = arith.constant 0 : index
    %c0_0 = arith.constant 0 : index
    %0 = vector.load %arg0[%c0, %c0_0] : memref<8x16xf32, #tpu.memory_space<vmem>>, vector<8x16xf32>
    %c0_1 = arith.constant 0 : index
    %c0_2 = arith.constant 0 : index
    %1 = vector.load %arg1[%c0_1, %c0_2] : memref<16x128xf32, #tpu.memory_space<vmem>>, vector<16x128xf32>
    %cst = arith.constant dense<0.000000e+00> : vector<8x128xf32>
    %2 = tpu.matmul %0, %1, %cst {dimension_numbers = #tpu.dot_dimension_numbers<[1], [0], [0], [1], [0, 0, 1, 1], [], []>} : vector<8x16xf32>, vector<16x128xf32>, vector<8x128xf32> -> vector<8x128xf32>
    %c0_3 = arith.constant 0 : index
    %c0_4 = arith.constant 0 : index
    %3 = vector.load %arg3[%c0_3, %c0_4] : memref<1x128xf32, #tpu.memory_space<vmem>>, vector<1x128xf32>
    %4 = vector.broadcast %3 : vector<1x128xf32> to vector<8x128xf32>
    %5 = arith.addf %2, %4 : vector<8x128xf32>
    %c0_5 = arith.constant 0 : index
    %c0_6 = arith.constant 0 : index
    %6 = vector.load %arg2[%c0_5, %c0_6] : memref<32x128xf32, #tpu.memory_space<vmem>>, vector<32x128xf32>
    %cst_7 = arith.constant 0.000000e+00 : f32
    %7 = vector.broadcast %cst_7 : f32 to vector<1x32xf32>
    %cst_8 = arith.constant 0.000000e+00 : f32
    %8 = vector.broadcast %cst_8 : f32 to vector<1x32xf32>
    %9 = vector.extract_strided_slice %5 {offsets = [0, 0], sizes = [1, 128], strides = [1, 1]} : vector<8x128xf32> to vector<1x128xf32>
    %cst_9 = arith.constant dense<0.000000e+00> : vector<1x128xf32>
    %10 = tpu.matmul %7, %6, %cst_9 {dimension_numbers = #tpu.dot_dimension_numbers<[1], [0], [0], [1], [0, 0, 1, 1], [], []>} : vector<1x32xf32>, vector<32x128xf32>, vector<1x128xf32> -> vector<1x128xf32>
    %11 = arith.addf %9, %10 : vector<1x128xf32>
    %12 = vector.extract_strided_slice %11 {offsets = [0, 0], sizes = [1, 96], strides = [1, 1]} : vector<1x128xf32> to vector<1x96xf32>
    %13 = arith.negf %12 : vector<1x96xf32>
    %14 = math.exp %13 : vector<1x96xf32>
    %cst_10 = arith.constant 1.000000e+00 : f32
    %15 = vector.broadcast %cst_10 : f32 to vector<1x96xf32>
    %16 = arith.addf %15, %14 : vector<1x96xf32>
    %17 = arith.divf %15, %16 : vector<1x96xf32>
    %18 = vector.extract_strided_slice %17 {offsets = [0, 0], sizes = [1, 32], strides = [1, 1]} : vector<1x96xf32> to vector<1x32xf32>
    %19 = vector.extract_strided_slice %17 {offsets = [0, 32], sizes = [1, 32], strides = [1, 1]} : vector<1x96xf32> to vector<1x32xf32>
    %20 = vector.extract_strided_slice %17 {offsets = [0, 64], sizes = [1, 32], strides = [1, 1]} : vector<1x96xf32> to vector<1x32xf32>
    %21 = vector.extract_strided_slice %11 {offsets = [0, 96], sizes = [1, 32], strides = [1, 1]} : vector<1x128xf32> to vector<1x32xf32>
    %22 = math.tanh %21 : vector<1x32xf32>
    %23 = arith.mulf %19, %8 : vector<1x32xf32>
    %24 = arith.mulf %18, %22 : vector<1x32xf32>
    %25 = arith.addf %23, %24 : vector<1x32xf32>
    %26 = math.tanh %25 : vector<1x32xf32>
    %27 = arith.mulf %20, %26 : vector<1x32xf32>
    %28 = vector.extract_strided_slice %5 {offsets = [1, 0], sizes = [1, 128], strides = [1, 1]} : vector<8x128xf32> to vector<1x128xf32>
    %cst_11 = arith.constant dense<0.000000e+00> : vector<1x128xf32>
    %29 = tpu.matmul %27, %6, %cst_11 {dimension_numbers = #tpu.dot_dimension_numbers<[1], [0], [0], [1], [0, 0, 1, 1], [], []>} : vector<1x32xf32>, vector<32x128xf32>, vector<1x128xf32> -> vector<1x128xf32>
    %30 = arith.addf %28, %29 : vector<1x128xf32>
    %31 = vector.extract_strided_slice %30 {offsets = [0, 0], sizes = [1, 96], strides = [1, 1]} : vector<1x128xf32> to vector<1x96xf32>
    %32 = arith.negf %31 : vector<1x96xf32>
    %33 = math.exp %32 : vector<1x96xf32>
    %cst_12 = arith.constant 1.000000e+00 : f32
    %34 = vector.broadcast %cst_12 : f32 to vector<1x96xf32>
    %35 = arith.addf %34, %33 : vector<1x96xf32>
    %36 = arith.divf %34, %35 : vector<1x96xf32>
    %37 = vector.extract_strided_slice %36 {offsets = [0, 0], sizes = [1, 32], strides = [1, 1]} : vector<1x96xf32> to vector<1x32xf32>
    %38 = vector.extract_strided_slice %36 {offsets = [0, 32], sizes = [1, 32], strides = [1, 1]} : vector<1x96xf32> to vector<1x32xf32>
    %39 = vector.extract_strided_slice %36 {offsets = [0, 64], sizes = [1, 32], strides = [1, 1]} : vector<1x96xf32> to vector<1x32xf32>
    %40 = vector.extract_strided_slice %30 {offsets = [0, 96], sizes = [1, 32], strides = [1, 1]} : vector<1x128xf32> to vector<1x32xf32>
    %41 = math.tanh %40 : vector<1x32xf32>
    %42 = arith.mulf %38, %25 : vector<1x32xf32>
    %43 = arith.mulf %37, %41 : vector<1x32xf32>
    %44 = arith.addf %42, %43 : vector<1x32xf32>
    %45 = math.tanh %44 : vector<1x32xf32>
    %46 = arith.mulf %39, %45 : vector<1x32xf32>
    %47 = vector.extract_strided_slice %5 {offsets = [2, 0], sizes = [1, 128], strides = [1, 1]} : vector<8x128xf32> to vector<1x128xf32>
    %cst_13 = arith.constant dense<0.000000e+00> : vector<1x128xf32>
    %48 = tpu.matmul %46, %6, %cst_13 {dimension_numbers = #tpu.dot_dimension_numbers<[1], [0], [0], [1], [0, 0, 1, 1], [], []>} : vector<1x32xf32>, vector<32x128xf32>, vector<1x128xf32> -> vector<1x128xf32>
    %49 = arith.addf %47, %48 : vector<1x128xf32>
    %50 = vector.extract_strided_slice %49 {offsets = [0, 0], sizes = [1, 96], strides = [1, 1]} : vector<1x128xf32> to vector<1x96xf32>
    %51 = arith.negf %50 : vector<1x96xf32>
    %52 = math.exp %51 : vector<1x96xf32>
    %cst_14 = arith.constant 1.000000e+00 : f32
    %53 = vector.broadcast %cst_14 : f32 to vector<1x96xf32>
    %54 = arith.addf %53, %52 : vector<1x96xf32>
    %55 = arith.divf %53, %54 : vector<1x96xf32>
    %56 = vector.extract_strided_slice %55 {offsets = [0, 0], sizes = [1, 32], strides = [1, 1]} : vector<1x96xf32> to vector<1x32xf32>
    %57 = vector.extract_strided_slice %55 {offsets = [0, 32], sizes = [1, 32], strides = [1, 1]} : vector<1x96xf32> to vector<1x32xf32>
    %58 = vector.extract_strided_slice %55 {offsets = [0, 64], sizes = [1, 32], strides = [1, 1]} : vector<1x96xf32> to vector<1x32xf32>
    %59 = vector.extract_strided_slice %49 {offsets = [0, 96], sizes = [1, 32], strides = [1, 1]} : vector<1x128xf32> to vector<1x32xf32>
    %60 = math.tanh %59 : vector<1x32xf32>
    %61 = arith.mulf %57, %44 : vector<1x32xf32>
    %62 = arith.mulf %56, %60 : vector<1x32xf32>
    %63 = arith.addf %61, %62 : vector<1x32xf32>
    %64 = math.tanh %63 : vector<1x32xf32>
    %65 = arith.mulf %58, %64 : vector<1x32xf32>
    %66 = vector.extract_strided_slice %5 {offsets = [3, 0], sizes = [1, 128], strides = [1, 1]} : vector<8x128xf32> to vector<1x128xf32>
    %cst_15 = arith.constant dense<0.000000e+00> : vector<1x128xf32>
    %67 = tpu.matmul %65, %6, %cst_15 {dimension_numbers = #tpu.dot_dimension_numbers<[1], [0], [0], [1], [0, 0, 1, 1], [], []>} : vector<1x32xf32>, vector<32x128xf32>, vector<1x128xf32> -> vector<1x128xf32>
    %68 = arith.addf %66, %67 : vector<1x128xf32>
    %69 = vector.extract_strided_slice %68 {offsets = [0, 0], sizes = [1, 96], strides = [1, 1]} : vector<1x128xf32> to vector<1x96xf32>
    %70 = arith.negf %69 : vector<1x96xf32>
    %71 = math.exp %70 : vector<1x96xf32>
    %cst_16 = arith.constant 1.000000e+00 : f32
    %72 = vector.broadcast %cst_16 : f32 to vector<1x96xf32>
    %73 = arith.addf %72, %71 : vector<1x96xf32>
    %74 = arith.divf %72, %73 : vector<1x96xf32>
    %75 = vector.extract_strided_slice %74 {offsets = [0, 0], sizes = [1, 32], strides = [1, 1]} : vector<1x96xf32> to vector<1x32xf32>
    %76 = vector.extract_strided_slice %74 {offsets = [0, 32], sizes = [1, 32], strides = [1, 1]} : vector<1x96xf32> to vector<1x32xf32>
    %77 = vector.extract_strided_slice %74 {offsets = [0, 64], sizes = [1, 32], strides = [1, 1]} : vector<1x96xf32> to vector<1x32xf32>
    %78 = vector.extract_strided_slice %68 {offsets = [0, 96], sizes = [1, 32], strides = [1, 1]} : vector<1x128xf32> to vector<1x32xf32>
    %79 = math.tanh %78 : vector<1x32xf32>
    %80 = arith.mulf %76, %63 : vector<1x32xf32>
    %81 = arith.mulf %75, %79 : vector<1x32xf32>
    %82 = arith.addf %80, %81 : vector<1x32xf32>
    %83 = math.tanh %82 : vector<1x32xf32>
    %84 = arith.mulf %77, %83 : vector<1x32xf32>
    %85 = vector.extract_strided_slice %5 {offsets = [4, 0], sizes = [1, 128], strides = [1, 1]} : vector<8x128xf32> to vector<1x128xf32>
    %cst_17 = arith.constant dense<0.000000e+00> : vector<1x128xf32>
    %86 = tpu.matmul %84, %6, %cst_17 {dimension_numbers = #tpu.dot_dimension_numbers<[1], [0], [0], [1], [0, 0, 1, 1], [], []>} : vector<1x32xf32>, vector<32x128xf32>, vector<1x128xf32> -> vector<1x128xf32>
    %87 = arith.addf %85, %86 : vector<1x128xf32>
    %88 = vector.extract_strided_slice %87 {offsets = [0, 0], sizes = [1, 96], strides = [1, 1]} : vector<1x128xf32> to vector<1x96xf32>
    %89 = arith.negf %88 : vector<1x96xf32>
    %90 = math.exp %89 : vector<1x96xf32>
    %cst_18 = arith.constant 1.000000e+00 : f32
    %91 = vector.broadcast %cst_18 : f32 to vector<1x96xf32>
    %92 = arith.addf %91, %90 : vector<1x96xf32>
    %93 = arith.divf %91, %92 : vector<1x96xf32>
    %94 = vector.extract_strided_slice %93 {offsets = [0, 0], sizes = [1, 32], strides = [1, 1]} : vector<1x96xf32> to vector<1x32xf32>
    %95 = vector.extract_strided_slice %93 {offsets = [0, 32], sizes = [1, 32], strides = [1, 1]} : vector<1x96xf32> to vector<1x32xf32>
    %96 = vector.extract_strided_slice %93 {offsets = [0, 64], sizes = [1, 32], strides = [1, 1]} : vector<1x96xf32> to vector<1x32xf32>
    %97 = vector.extract_strided_slice %87 {offsets = [0, 96], sizes = [1, 32], strides = [1, 1]} : vector<1x128xf32> to vector<1x32xf32>
    %98 = math.tanh %97 : vector<1x32xf32>
    %99 = arith.mulf %95, %82 : vector<1x32xf32>
    %100 = arith.mulf %94, %98 : vector<1x32xf32>
    %101 = arith.addf %99, %100 : vector<1x32xf32>
    %102 = math.tanh %101 : vector<1x32xf32>
    %103 = arith.mulf %96, %102 : vector<1x32xf32>
    %104 = vector.extract_strided_slice %5 {offsets = [5, 0], sizes = [1, 128], strides = [1, 1]} : vector<8x128xf32> to vector<1x128xf32>
    %cst_19 = arith.constant dense<0.000000e+00> : vector<1x128xf32>
    %105 = tpu.matmul %103, %6, %cst_19 {dimension_numbers = #tpu.dot_dimension_numbers<[1], [0], [0], [1], [0, 0, 1, 1], [], []>} : vector<1x32xf32>, vector<32x128xf32>, vector<1x128xf32> -> vector<1x128xf32>
    %106 = arith.addf %104, %105 : vector<1x128xf32>
    %107 = vector.extract_strided_slice %106 {offsets = [0, 0], sizes = [1, 96], strides = [1, 1]} : vector<1x128xf32> to vector<1x96xf32>
    %108 = arith.negf %107 : vector<1x96xf32>
    %109 = math.exp %108 : vector<1x96xf32>
    %cst_20 = arith.constant 1.000000e+00 : f32
    %110 = vector.broadcast %cst_20 : f32 to vector<1x96xf32>
    %111 = arith.addf %110, %109 : vector<1x96xf32>
    %112 = arith.divf %110, %111 : vector<1x96xf32>
    %113 = vector.extract_strided_slice %112 {offsets = [0, 0], sizes = [1, 32], strides = [1, 1]} : vector<1x96xf32> to vector<1x32xf32>
    %114 = vector.extract_strided_slice %112 {offsets = [0, 32], sizes = [1, 32], strides = [1, 1]} : vector<1x96xf32> to vector<1x32xf32>
    %115 = vector.extract_strided_slice %112 {offsets = [0, 64], sizes = [1, 32], strides = [1, 1]} : vector<1x96xf32> to vector<1x32xf32>
    %116 = vector.extract_strided_slice %106 {offsets = [0, 96], sizes = [1, 32], strides = [1, 1]} : vector<1x128xf32> to vector<1x32xf32>
    %117 = math.tanh %116 : vector<1x32xf32>
    %118 = arith.mulf %114, %101 : vector<1x32xf32>
    %119 = arith.mulf %113, %117 : vector<1x32xf32>
    %120 = arith.addf %118, %119 : vector<1x32xf32>
    %121 = math.tanh %120 : vector<1x32xf32>
    %122 = arith.mulf %115, %121 : vector<1x32xf32>
    %123 = vector.extract_strided_slice %5 {offsets = [6, 0], sizes = [1, 128], strides = [1, 1]} : vector<8x128xf32> to vector<1x128xf32>
    %cst_21 = arith.constant dense<0.000000e+00> : vector<1x128xf32>
    %124 = tpu.matmul %122, %6, %cst_21 {dimension_numbers = #tpu.dot_dimension_numbers<[1], [0], [0], [1], [0, 0, 1, 1], [], []>} : vector<1x32xf32>, vector<32x128xf32>, vector<1x128xf32> -> vector<1x128xf32>
    %125 = arith.addf %123, %124 : vector<1x128xf32>
    %126 = vector.extract_strided_slice %125 {offsets = [0, 0], sizes = [1, 96], strides = [1, 1]} : vector<1x128xf32> to vector<1x96xf32>
    %127 = arith.negf %126 : vector<1x96xf32>
    %128 = math.exp %127 : vector<1x96xf32>
    %cst_22 = arith.constant 1.000000e+00 : f32
    %129 = vector.broadcast %cst_22 : f32 to vector<1x96xf32>
    %130 = arith.addf %129, %128 : vector<1x96xf32>
    %131 = arith.divf %129, %130 : vector<1x96xf32>
    %132 = vector.extract_strided_slice %131 {offsets = [0, 0], sizes = [1, 32], strides = [1, 1]} : vector<1x96xf32> to vector<1x32xf32>
    %133 = vector.extract_strided_slice %131 {offsets = [0, 32], sizes = [1, 32], strides = [1, 1]} : vector<1x96xf32> to vector<1x32xf32>
    %134 = vector.extract_strided_slice %131 {offsets = [0, 64], sizes = [1, 32], strides = [1, 1]} : vector<1x96xf32> to vector<1x32xf32>
    %135 = vector.extract_strided_slice %125 {offsets = [0, 96], sizes = [1, 32], strides = [1, 1]} : vector<1x128xf32> to vector<1x32xf32>
    %136 = math.tanh %135 : vector<1x32xf32>
    %137 = arith.mulf %133, %120 : vector<1x32xf32>
    %138 = arith.mulf %132, %136 : vector<1x32xf32>
    %139 = arith.addf %137, %138 : vector<1x32xf32>
    %140 = math.tanh %139 : vector<1x32xf32>
    %141 = arith.mulf %134, %140 : vector<1x32xf32>
    %142 = vector.extract_strided_slice %5 {offsets = [7, 0], sizes = [1, 128], strides = [1, 1]} : vector<8x128xf32> to vector<1x128xf32>
    %cst_23 = arith.constant dense<0.000000e+00> : vector<1x128xf32>
    %143 = tpu.matmul %141, %6, %cst_23 {dimension_numbers = #tpu.dot_dimension_numbers<[1], [0], [0], [1], [0, 0, 1, 1], [], []>} : vector<1x32xf32>, vector<32x128xf32>, vector<1x128xf32> -> vector<1x128xf32>
    %144 = arith.addf %142, %143 : vector<1x128xf32>
    %145 = vector.extract_strided_slice %144 {offsets = [0, 0], sizes = [1, 96], strides = [1, 1]} : vector<1x128xf32> to vector<1x96xf32>
    %146 = arith.negf %145 : vector<1x96xf32>
    %147 = math.exp %146 : vector<1x96xf32>
    %cst_24 = arith.constant 1.000000e+00 : f32
    %148 = vector.broadcast %cst_24 : f32 to vector<1x96xf32>
    %149 = arith.addf %148, %147 : vector<1x96xf32>
    %150 = arith.divf %148, %149 : vector<1x96xf32>
    %151 = vector.extract_strided_slice %150 {offsets = [0, 0], sizes = [1, 32], strides = [1, 1]} : vector<1x96xf32> to vector<1x32xf32>
    %152 = vector.extract_strided_slice %150 {offsets = [0, 32], sizes = [1, 32], strides = [1, 1]} : vector<1x96xf32> to vector<1x32xf32>
    %153 = vector.extract_strided_slice %150 {offsets = [0, 64], sizes = [1, 32], strides = [1, 1]} : vector<1x96xf32> to vector<1x32xf32>
    %154 = vector.extract_strided_slice %144 {offsets = [0, 96], sizes = [1, 32], strides = [1, 1]} : vector<1x128xf32> to vector<1x32xf32>
    %155 = math.tanh %154 : vector<1x32xf32>
    %156 = arith.mulf %152, %139 : vector<1x32xf32>
    %157 = arith.mulf %151, %155 : vector<1x32xf32>
    %158 = arith.addf %156, %157 : vector<1x32xf32>
    %159 = math.tanh %158 : vector<1x32xf32>
    %160 = arith.mulf %153, %159 : vector<1x32xf32>
    %161 = tpu.concatenate %27, %46, %65, %84, %103, %122, %141, %160 in 0 : vector<1x32xf32>, vector<1x32xf32>, vector<1x32xf32>, vector<1x32xf32>, vector<1x32xf32>, vector<1x32xf32>, vector<1x32xf32>, vector<1x32xf32> -> vector<8x32xf32>
    %c0_25 = arith.constant 0 : index
    %c0_26 = arith.constant 0 : index
    %162 = vector.load %arg4[%c0_25, %c0_26] : memref<32x128xf32, #tpu.memory_space<vmem>>, vector<32x128xf32>
    %cst_27 = arith.constant dense<0.000000e+00> : vector<8x128xf32>
    %163 = tpu.matmul %161, %162, %cst_27 {dimension_numbers = #tpu.dot_dimension_numbers<[1], [0], [0], [1], [0, 0, 1, 1], [], []>} : vector<8x32xf32>, vector<32x128xf32>, vector<8x128xf32> -> vector<8x128xf32>
    %c0_28 = arith.constant 0 : index
    %c0_29 = arith.constant 0 : index
    %164 = vector.load %arg5[%c0_28, %c0_29] : memref<1x128xf32, #tpu.memory_space<vmem>>, vector<1x128xf32>
    %165 = vector.broadcast %164 : vector<1x128xf32> to vector<8x128xf32>
    %166 = arith.addf %163, %165 : vector<8x128xf32>
    %c0_30 = arith.constant 0 : index
    %c0_31 = arith.constant 0 : index
    %167 = vector.load %arg6[%c0_30, %c0_31] : memref<8x128xf32, #tpu.memory_space<vmem>>, vector<8x128xf32>
    tpu.vector_store %arg6[%c0_30, %c0_31], %166 {strides = array<i32>} : memref<8x128xf32, #tpu.memory_space<vmem>>, vector<8x128xf32>,
    return
  }
}

</mosaic_0001>

<llo_original>
// kernel: tpu_custom_call.1
$region0: #{tpu_custom_call.1}
  #allocation0 [shape = 'u32[]', space=smem, size = 0x4, offset = 0x4, fixed_abs, tag = 'smem constant byte address 0x4 - core index']
  #allocation1 [shape = 'u32[144,128]{1,0:T(1,128)}', space=vmem, size = 0x12000, scoped, tag = 'internal scratch']
  %s0 = inlined_call_operand.hbm [shape: f32[8,16], index: 0, kind: input, shape index: {}]
  %s1 = inlined_call_operand.hbm [shape: f32[16,128], index: 1, kind: input, shape index: {}]
  %s2 = inlined_call_operand.hbm [shape: f32[32,128], index: 2, kind: input, shape index: {}]
  %s3 = inlined_call_operand.vmem [shape: f32[1,128], index: 3, kind: input, shape index: {}]
  %s4 = inlined_call_operand.hbm [shape: f32[32,128], index: 4, kind: input, shape index: {}]
  %s5 = inlined_call_operand.vmem [shape: f32[1,128], index: 5, kind: input, shape index: {}]
  %s6 = inlined_call_operand.hbm [shape: f32[8,128], index: 6, kind: output, shape index: {}]
  %s7 = sld [smem:[#allocation0]]
  $region50: #{tpu_custom_call.1} parent=0
    _
  %s9 = ssub.s32 1, %s7
  %s10 = scalar_select 0, %s9, %s7
  $region1: #{tpu_custom_call.1} parent=0
    #allocation2 [shape = 'u8[4096]{0}', space=vmem, size = 0x1000, scoped, tag = 'input window, operand 0, single buffered']
    #allocation3 [shape = 's32[1]{0}', space=sflag, size = 0x4, scoped, tag = 'scoped memory for tpu_custom_call.1']
    #allocation4 [shape = 's32[1]{0}', space=sflag, size = 0x4, scoped, tag = 'scoped memory for tpu_custom_call.1']
    #allocation5 [shape = 'u8[8192]{0}', space=vmem, size = 0x2000, scoped, tag = 'input window, operand 1, single buffered']
    #allocation6 [shape = 's32[1]{0}', space=sflag, size = 0x4, scoped, tag = 'scoped memory for tpu_custom_call.1']
    #allocation7 [shape = 'u8[16384]{0}', space=vmem, size = 0x4000, scoped, tag = 'input window, operand 2, single buffered']
    #allocation8 [shape = 'u8[16384]{0}', space=vmem, size = 0x4000, scoped, tag = 'input window, operand 4, single buffered']
    #allocation9 [shape = 's32[1]{0}', space=sflag, size = 0x4, scoped, tag = 'scoped memory for tpu_custom_call.1']
    #allocation10 [shape = 'u8[4096]{0}', space=vmem, size = 0x1000, scoped, tag = 'output window, operand 0, single buffered']
    %11 = vsyncpa [#allocation3], 0
    %12 = vsyncpa [#allocation6], 0
    %13 = vsyncpa [#allocation9], 0
    %14 = vsyncpa [#allocation4], 0
    // Predicated region
    $region2: #{tpu_custom_call.1} parent=1 // pred_check
      _
    $region3: #{tpu_custom_call.1} parent=1 // pred_check_branch
      %16 = sbr.rel (0) target = $region5
    $region4: #{tpu_custom_call.1} parent=1 // pred_region
      %s18 = ssub.s32 128, 128
      %19 = vsyncadd [#allocation3], %s18
      %s21 = sshll.u32 [#allocation2], 4
      %s22 = int_to_ptr.vmem [resolvable:$true] %s21
      %24 = dma.hbm_to_vmem [thread:$0]  %s0, 128, %s22, [#allocation3]
    $region5: #{tpu_custom_call.1} parent=1 // pred_fallthru
      _
    // Predicated region
    $region6: #{tpu_custom_call.1} parent=1 // pred_check
      _
    $region7: #{tpu_custom_call.1} parent=1 // pred_check_branch
      %26 = sbr.rel (0) target = $region9
    $region8: #{tpu_custom_call.1} parent=1 // pred_region
      %s28 = ssub.s32 256, 256
      %29 = vsyncadd [#allocation6], %s28
      %s30 = sshll.u32 [#allocation5], 4
      %s31 = int_to_ptr.vmem [resolvable:$true] %s30
      %36 = dma.hbm_to_vmem [thread:$0]  %s1, 256, %s31, [#allocation6], 128, 128, 8
    $region9: #{tpu_custom_call.1} parent=1 // pred_fallthru
      _
    // Predicated region
    $region10: #{tpu_custom_call.1} parent=1 // pred_check
      _
    $region11: #{tpu_custom_call.1} parent=1 // pred_check_branch
      %38 = sbr.rel (0) target = $region13
    $region12: #{tpu_custom_call.1} parent=1 // pred_region
      %s40 = ssub.s32 512, 512
      %41 = vsyncadd [#allocation6], %s40
      %s42 = sshll.u32 [#allocation7], 4
      %s43 = int_to_ptr.vmem [resolvable:$true] %s42
      %48 = dma.hbm_to_vmem [thread:$0]  %s2, 512, %s43, [#allocation6], 128, 128, 8
    $region13: #{tpu_custom_call.1} parent=1 // pred_fallthru
      _
    // Predicated region
    $region14: #{tpu_custom_call.1} parent=1 // pred_check
      _
    $region15: #{tpu_custom_call.1} parent=1 // pred_check_branch
      %50 = sbr.rel (0) target = $region17
    $region16: #{tpu_custom_call.1} parent=1 // pred_region
      _
    $region17: #{tpu_custom_call.1} parent=1 // pred_fallthru
      _
    // Predicated region
    $region18: #{tpu_custom_call.1} parent=1 // pred_check
      _
    $region19: #{tpu_custom_call.1} parent=1 // pred_check_branch
      %52 = sbr.rel (0) target = $region21
    $region20: #{tpu_custom_call.1} parent=1 // pred_region
      %s54 = ssub.s32 512, 512
      %55 = vsyncadd [#allocation9], %s54
      %s56 = sshll.u32 [#allocation8], 4
      %s57 = int_to_ptr.vmem [resolvable:$true] %s56
      %62 = dma.hbm_to_vmem [thread:$0]  %s4, 512, %s57, [#allocation9], 128, 128, 8
    $region21: #{tpu_custom_call.1} parent=1 // pred_fallthru
      _
    // Predicated region
    $region22: #{tpu_custom_call.1} parent=1 // pred_check
      _
    $region23: #{tpu_custom_call.1} parent=1 // pred_check_branch
      %64 = sbr.rel (0) target = $region25
    $region24: #{tpu_custom_call.1} parent=1 // pred_region
      _
    $region25: #{tpu_custom_call.1} parent=1 // pred_fallthru
      _
    // Predicated region
    $region26: #{tpu_custom_call.1} parent=1 // pred_check
      _
    $region27: #{tpu_custom_call.1} parent=1 // pred_check_branch
      %66 = sbr.rel (0) target = $region29
    $region28: #{tpu_custom_call.1} parent=1 // pred_region
      %67 = dma.done [#allocation3], 128
    $region29: #{tpu_custom_call.1} parent=1 // pred_fallthru
      _
    // Predicated region
    $region30: #{tpu_custom_call.1} parent=1 // pred_check
      _
    $region31: #{tpu_custom_call.1} parent=1 // pred_check_branch
      %69 = sbr.rel (0) target = $region33
    $region32: #{tpu_custom_call.1} parent=1 // pred_region
      %70 = dma.done [#allocation6], 256
    $region33: #{tpu_custom_call.1} parent=1 // pred_fallthru
      _
    // Predicated region
    $region34: #{tpu_custom_call.1} parent=1 // pred_check
      _
    $region35: #{tpu_custom_call.1} parent=1 // pred_check_branch
      %72 = sbr.rel (0) target = $region37
    $region36: #{tpu_custom_call.1} parent=1 // pred_region
      %73 = dma.done [#allocation6], 512
    $region37: #{tpu_custom_call.1} parent=1 // pred_fallthru
      _
    // Predicated region
    $region38: #{tpu_custom_call.1} parent=1 // pred_check
      _
    $region39: #{tpu_custom_call.1} parent=1 // pred_check_branch
      %75 = sbr.rel (0) target = $region41
    $region40: #{tpu_custom_call.1} parent=1 // pred_region
      %76 = dma.done [#allocation9], 512
    $region41: #{tpu_custom_call.1} parent=1 // pred_fallthru
      _
    %v77 = vld [vmem:[#allocation2] sm:$0xff]
    %v78 = vld [vmem:[#allocation5] sm:$0xff]
    %v79 = vld [vmem:[#allocation5 + $0x8] sm:$0xff]
    %v80 = vld [vmem:[%s3] sm:$0x1]
    %v82 = vlaneseq
    %v83 = vshrl.u32 %v82, 7
    %v84 = vsub.s32 0, %v83
    %v85 = vrot.slane %v80, %v84
    %vm87 = vcmask 130048
    %v89 = vsel %vm87, %v77, 0
    %91 = vmatprep.subr.mxu0 0.0
    %92 = vmatpush1.msra.mxu0 %v78
    %93 = vmatprep.subr.mxu0 0.0
    %94 = vmatpush1.msra.mxu0 %v79
    %95 = vmatprep.subr.mxu0 0.0
    %96 = vmatpush1.msra.mxu0 0.0
    %97 = vmatprep.subr.mxu0 0.0
    %98 = vmatpush1.msra.mxu0 0.0
    %99 = vmatprep.subr.mxu0 0.0
    %100 = vmatpush1.msra.mxu0 0.0
    %101 = vmatprep.subr.mxu0 0.0
    %102 = vmatpush1.msra.mxu0 0.0
    %103 = vmatprep.subr.mxu0 0.0
    %104 = vmatpush1.msra.mxu0 0.0
    %105 = vmatprep.subr.mxu0 0.0
    %106 = vmatpush1.msra.mxu0 0.0
    %107 = vmatprep.subr.mxu0 0.0
    %108 = vmatpush1.msra.mxu0 0.0
    %109 = vmatprep.subr.mxu0 0.0
    %110 = vmatpush1.msra.mxu0 0.0
    %111 = vmatprep.subr.mxu0 0.0
    %112 = vmatpush1.msra.mxu0 0.0
    %113 = vmatprep.subr.mxu0 0.0
    %114 = vmatpush1.msra.mxu0 0.0
    %115 = vmatprep.subr.mxu0 0.0
    %116 = vmatpush1.msra.mxu0 0.0
    %117 = vmatprep.subr.mxu0 0.0
    %118 = vmatpush1.msra.mxu0 0.0
    %119 = vmatprep.subr.mxu0 0.0
    %120 = vmatpush1.msra.mxu0 0.0
    %121 = vmatprep.subr.mxu0 0.0
    %122 = vmatpush1.msra.mxu0 0.0
    %123 = vmatprep.subr.mxu0 0.0
    %124 = vmatpush1.msra.mxu0 0.0
    %125 = vmatprep.subr.mxu0 0.0
    %126 = vmatpush1.msra.mxu0 0.0
    %127 = vmatprep.subr.mxu0 0.0
    %128 = vmatpush1.msra.mxu0 0.0
    %129 = vmatprep.subr.mxu0 0.0
    %130 = vmatpush1.msra.mxu0 0.0
    %131 = vmatprep.subr.mxu0 0.0
    %132 = vmatpush1.msra.mxu0 0.0
    %133 = vmatprep.subr.mxu0 0.0
    %134 = vmatpush1.msra.mxu0 0.0
    %135 = vmatprep.subr.mxu0 0.0
    %136 = vmatpush1.msra.mxu0 0.0
    %137 = vmatprep.subr.mxu0 0.0
    %138 = vmatpush1.msra.mxu0 0.0
    %139 = vmatprep.subr.mxu0 0.0
    %140 = vmatpush1.msra.mxu0 0.0
    %141 = vmatprep.subr.mxu0 0.0
    %142 = vmatpush1.msra.mxu0 0.0
    %143 = vmatprep.subr.mxu0 0.0
    %144 = vmatpush1.msra.mxu0 0.0
    %145 = vmatprep.subr.mxu0 0.0
    %146 = vmatpush1.msra.mxu0 0.0
    %147 = vmatprep.subr.mxu0 0.0
    %148 = vmatpush1.msra.mxu0 0.0
    %149 = vmatprep.subr.mxu0 0.0
    %150 = vmatpush1.msra.mxu0 0.0
    %151 = vmatprep.subr.mxu0 0.0
    %152 = vmatpush1.msra.mxu0 0.0
    %153 = vmatprep.subr.mxu0 0.0
    %154 = vmatpush1.msra.mxu0 0.0
    %155 = vmatprep.mubr.f32.mxu0 0.0
    %156 = vmatmul.mubr.f32.gmra.mrb[0].mxu0 %v89
    %v157 = vpop.f32.mrb[0].mxu0
    %v158 = vadd.f32 %v85, %v157
    %v159 = vpop.f32.mrb[0].mxu0
    %160 = vdwg.mxu0
    %v161 = vld [vmem:[#allocation7] sm:$0xff]
    %v162 = vld [vmem:[#allocation7 + $0x8] sm:$0xff]
    %v163 = vld [vmem:[#allocation7 + $0x10] sm:$0xff]
    %v164 = vld [vmem:[#allocation7 + $0x18] sm:$0xff]
    %vm165 = vcmask 261120
    %v167 = vsel %vm165, 0.0, 0
    %169 = vmatprep.subr.mxu0 0.0
    %170 = vmatpush1.msra.mxu0 %v161
    %171 = vmatprep.subr.mxu0 0.0
    %172 = vmatpush1.msra.mxu0 %v162
    %173 = vmatprep.subr.mxu0 0.0
    %174 = vmatpush1.msra.mxu0 %v163
    %175 = vmatprep.subr.mxu0 0.0
    %176 = vmatpush1.msra.mxu0 %v164
    %177 = vmatprep.subr.mxu0 0.0
    %178 = vmatpush1.msra.mxu0 0.0
    %179 = vmatprep.subr.mxu0 0.0
    %180 = vmatpush1.msra.mxu0 0.0
    %181 = vmatprep.subr.mxu0 0.0
    %182 = vmatpush1.msra.mxu0 0.0
    %183 = vmatprep.subr.mxu0 0.0
    %184 = vmatpush1.msra.mxu0 0.0
    %185 = vmatprep.subr.mxu0 0.0
    %186 = vmatpush1.msra.mxu0 0.0
    %187 = vmatprep.subr.mxu0 0.0
    %188 = vmatpush1.msra.mxu0 0.0
    %189 = vmatprep.subr.mxu0 0.0
    %190 = vmatpush1.msra.mxu0 0.0
    %191 = vmatprep.subr.mxu0 0.0
    %192 = vmatpush1.msra.mxu0 0.0
    %193 = vmatprep.subr.mxu0 0.0
    %194 = vmatpush1.msra.mxu0 0.0
    %195 = vmatprep.subr.mxu0 0.0
    %196 = vmatpush1.msra.mxu0 0.0
    %197 = vmatprep.subr.mxu0 0.0
    %198 = vmatpush1.msra.mxu0 0.0
    %199 = vmatprep.subr.mxu0 0.0
    %200 = vmatpush1.msra.mxu0 0.0
    %201 = vmatprep.subr.mxu0 0.0
    %202 = vmatpush1.msra.mxu0 0.0
    %203 = vmatprep.subr.mxu0 0.0
    %204 = vmatpush1.msra.mxu0 0.0
    %205 = vmatprep.subr.mxu0 0.0
    %206 = vmatpush1.msra.mxu0 0.0
    %207 = vmatprep.subr.mxu0 0.0
    %208 = vmatpush1.msra.mxu0 0.0
    %209 = vmatprep.subr.mxu0 0.0
    %210 = vmatpush1.msra.mxu0 0.0
    %211 = vmatprep.subr.mxu0 0.0
    %212 = vmatpush1.msra.mxu0 0.0
    %213 = vmatprep.subr.mxu0 0.0
    %214 = vmatpush1.msra.mxu0 0.0
    %215 = vmatprep.subr.mxu0 0.0
    %216 = vmatpush1.msra.mxu0 0.0
    %217 = vmatprep.subr.mxu0 0.0
    %218 = vmatpush1.msra.mxu0 0.0
    %219 = vmatprep.subr.mxu0 0.0
    %220 = vmatpush1.msra.mxu0 0.0
    %221 = vmatprep.subr.mxu0 0.0
    %222 = vmatpush1.msra.mxu0 0.0
    %223 = vmatprep.subr.mxu0 0.0
    %224 = vmatpush1.msra.mxu0 0.0
    %225 = vmatprep.subr.mxu0 0.0
    %226 = vmatpush1.msra.mxu0 0.0
    %227 = vmatprep.subr.mxu0 0.0
    %228 = vmatpush1.msra.mxu0 0.0
    %229 = vmatprep.subr.mxu0 0.0
    %230 = vmatpush1.msra.mxu0 0.0
    %231 = vmatprep.subr.mxu0 0.0
    %232 = vmatpush1.msra.mxu0 0.0
    %233 = vmatprep.mubr.f32.mxu0 0.0
    %234 = vmatmul.mubr.f32.gmra.mrb[0].mxu0 %v167
    %v235 = vpop.f32.mrb[0].mxu0
    %v236 = vadd.f32 0.0, %v235
    %v237 = vpop.f32.mrb[0].mxu0
    %238 = vdwg.mxu0
    %v239 = vadd.f32 %v158, %v236
    %v240 = vxor.u32 %v239, 2147483648
    %v241 = vmul.f32 %v240, 1.442695
    %v242 = vpow.pop %v241
    %v243 = vadd.f32 %v242, 1.0
    %v244 = vrcp.pop %v243
    %v245 = vmul.f32 1.0, %v244
    %v246 = vtanh.pop %v239
    %v247 = vmul.f32 %v245, 0.0
    %249 = vrot.lane.b32.xlu0 %v246, 32
    %v250 = vpop.permute.xlu0 %249
    %v252 = vmul.f32 %v245, %v250
    %254 = vrot.lane.b32.xlu0 %v252, 32
    %v255 = vpop.permute.xlu0 %254
    %v257 = vadd.f32 %v247, %v255
    %v258 = vtanh.pop %v257
    %260 = vrot.lane.b32.xlu0 %v258, 32
    %v261 = vpop.permute.xlu0 %260
    %v263 = vmul.f32 %v245, %v261
    %265 = vrot.lane.b32.xlu0 %v263, 64
    %v266 = vpop.permute.xlu0 %265
    %v267 = vsel %vm165, %v266, 0
    %269 = vmatprep.subr.mxu0 0.0
    %270 = vmatpush1.msra.mxu0 %v161
    %271 = vmatprep.subr.mxu0 0.0
    %272 = vmatpush1.msra.mxu0 %v162
    %273 = vmatprep.subr.mxu0 0.0
    %274 = vmatpush1.msra.mxu0 %v163
    %275 = vmatprep.subr.mxu0 0.0
    %276 = vmatpush1.msra.mxu0 %v164
    %277 = vmatprep.subr.mxu0 0.0
    %278 = vmatpush1.msra.mxu0 0.0
    %279 = vmatprep.subr.mxu0 0.0
    %280 = vmatpush1.msra.mxu0 0.0
    %281 = vmatprep.subr.mxu0 0.0
    %282 = vmatpush1.msra.mxu0 0.0
    %283 = vmatprep.subr.mxu0 0.0
    %284 = vmatpush1.msra.mxu0 0.0
    %285 = vmatprep.subr.mxu0 0.0
    %286 = vmatpush1.msra.mxu0 0.0
    %287 = vmatprep.subr.mxu0 0.0
    %288 = vmatpush1.msra.mxu0 0.0
    %289 = vmatprep.subr.mxu0 0.0
    %290 = vmatpush1.msra.mxu0 0.0
    %291 = vmatprep.subr.mxu0 0.0
    %292 = vmatpush1.msra.mxu0 0.0
    %293 = vmatprep.subr.mxu0 0.0
    %294 = vmatpush1.msra.mxu0 0.0
    %295 = vmatprep.subr.mxu0 0.0
    %296 = vmatpush1.msra.mxu0 0.0
    %297 = vmatprep.subr.mxu0 0.0
    %298 = vmatpush1.msra.mxu0 0.0
    %299 = vmatprep.subr.mxu0 0.0
    %300 = vmatpush1.msra.mxu0 0.0
    %301 = vmatprep.subr.mxu0 0.0
    %302 = vmatpush1.msra.mxu0 0.0
    %303 = vmatprep.subr.mxu0 0.0
    %304 = vmatpush1.msra.mxu0 0.0
    %305 = vmatprep.subr.mxu0 0.0
    %306 = vmatpush1.msra.mxu0 0.0
    %307 = vmatprep.subr.mxu0 0.0
    %308 = vmatpush1.msra.mxu0 0.0
    %309 = vmatprep.subr.mxu0 0.0
    %310 = vmatpush1.msra.mxu0 0.0
    %311 = vmatprep.subr.mxu0 0.0
    %312 = vmatpush1.msra.mxu0 0.0
    %313 = vmatprep.subr.mxu0 0.0
    %314 = vmatpush1.msra.mxu0 0.0
    %315 = vmatprep.subr.mxu0 0.0
    %316 = vmatpush1.msra.mxu0 0.0
    %317 = vmatprep.subr.mxu0 0.0
    %318 = vmatpush1.msra.mxu0 0.0
    %319 = vmatprep.subr.mxu0 0.0
    %320 = vmatpush1.msra.mxu0 0.0
    %321 = vmatprep.subr.mxu0 0.0
    %322 = vmatpush1.msra.mxu0 0.0
    %323 = vmatprep.subr.mxu0 0.0
    %324 = vmatpush1.msra.mxu0 0.0
    %325 = vmatprep.subr.mxu0 0.0
    %326 = vmatpush1.msra.mxu0 0.0
    %327 = vmatprep.subr.mxu0 0.0
    %328 = vmatpush1.msra.mxu0 0.0
    %329 = vmatprep.subr.mxu0 0.0
    %330 = vmatpush1.msra.mxu0 0.0
    %331 = vmatprep.subr.mxu0 0.0
    %332 = vmatpush1.msra.mxu0 0.0
    %333 = vmatprep.mubr.f32.mxu0 0.0
    %334 = vmatmul.mubr.f32.gmra.mrb[0].mxu0 %v267
    %v335 = vpop.f32.mrb[0].mxu0
    %v336 = vadd.f32 0.0, %v335
    %v337 = vpop.f32.mrb[0].mxu0
    %338 = vdwg.mxu0
    %v340 = vrot.slane %v336, 7
    %v342 = vadd.f32 %v158, %v340
    %v343 = vxor.u32 %v342, 2147483648
    %v344 = vmul.f32 %v343, 1.442695
    %v345 = vpow.pop %v344
    %v346 = vadd.f32 %v345, 1.0
    %v347 = vrcp.pop %v346
    %v348 = vmul.f32 1.0, %v347
    %v349 = vtanh.pop %v342
    %v351 = vrot.slane %v257, 7
    %v353 = vmul.f32 %v348, %v351
    %355 = vrot.lane.b32.xlu0 %v349, 32
    %v356 = vpop.permute.xlu0 %355
    %v358 = vmul.f32 %v348, %v356
    %360 = vrot.lane.b32.xlu0 %v358, 32
    %v361 = vpop.permute.xlu0 %360
    %v363 = vadd.f32 %v353, %v361
    %v364 = vtanh.pop %v363
    %366 = vrot.lane.b32.xlu0 %v364, 32
    %v367 = vpop.permute.xlu0 %366
    %v369 = vmul.f32 %v348, %v367
    %v371 = vrot.slane %v369, 1
    %372 = vrot.lane.b32.xlu0 %v371, 64
    %v373 = vpop.permute.xlu0 %372
    %v374 = vsel %vm165, %v373, 0
    %376 = vmatprep.subr.mxu0 0.0
    %377 = vmatpush1.msra.mxu0 %v161
    %378 = vmatprep.subr.mxu0 0.0
    %379 = vmatpush1.msra.mxu0 %v162
    %380 = vmatprep.subr.mxu0 0.0
    %381 = vmatpush1.msra.mxu0 %v163
    %382 = vmatprep.subr.mxu0 0.0
    %383 = vmatpush1.msra.mxu0 %v164
    %384 = vmatprep.subr.mxu0 0.0
    %385 = vmatpush1.msra.mxu0 0.0
    %386 = vmatprep.subr.mxu0 0.0
    %387 = vmatpush1.msra.mxu0 0.0
    %388 = vmatprep.subr.mxu0 0.0
    %389 = vmatpush1.msra.mxu0 0.0
    %390 = vmatprep.subr.mxu0 0.0
    %391 = vmatpush1.msra.mxu0 0.0
    %392 = vmatprep.subr.mxu0 0.0
    %393 = vmatpush1.msra.mxu0 0.0
    %394 = vmatprep.subr.mxu0 0.0
    %395 = vmatpush1.msra.mxu0 0.0
    %396 = vmatprep.subr.mxu0 0.0
    %397 = vmatpush1.msra.mxu0 0.0
    %398 = vmatprep.subr.mxu0 0.0
    %399 = vmatpush1.msra.mxu0 0.0
    %400 = vmatprep.subr.mxu0 0.0
    %401 = vmatpush1.msra.mxu0 0.0
    %402 = vmatprep.subr.mxu0 0.0
    %403 = vmatpush1.msra.mxu0 0.0
    %404 = vmatprep.subr.mxu0 0.0
    %405 = vmatpush1.msra.mxu0 0.0
    %406 = vmatprep.subr.mxu0 0.0
    %407 = vmatpush1.msra.mxu0 0.0
    %408 = vmatprep.subr.mxu0 0.0
    %409 = vmatpush1.msra.mxu0 0.0
    %410 = vmatprep.subr.mxu0 0.0
    %411 = vmatpush1.msra.mxu0 0.0
    %412 = vmatprep.subr.mxu0 0.0
    %413 = vmatpush1.msra.mxu0 0.0
    %414 = vmatprep.subr.mxu0 0.0
    %415 = vmatpush1.msra.mxu0 0.0
    %416 = vmatprep.subr.mxu0 0.0
    %417 = vmatpush1.msra.mxu0 0.0
    %418 = vmatprep.subr.mxu0 0.0
    %419 = vmatpush1.msra.mxu0 0.0
    %420 = vmatprep.subr.mxu0 0.0
    %421 = vmatpush1.msra.mxu0 0.0
    %422 = vmatprep.subr.mxu0 0.0
    %423 = vmatpush1.msra.mxu0 0.0
    %424 = vmatprep.subr.mxu0 0.0
    %425 = vmatpush1.msra.mxu0 0.0
    %426 = vmatprep.subr.mxu0 0.0
    %427 = vmatpush1.msra.mxu0 0.0
    %428 = vmatprep.subr.mxu0 0.0
    %429 = vmatpush1.msra.mxu0 0.0
    %430 = vmatprep.subr.mxu0 0.0
    %431 = vmatpush1.msra.mxu0 0.0
    %432 = vmatprep.subr.mxu0 0.0
    %433 = vmatpush1.msra.mxu0 0.0
    %434 = vmatprep.subr.mxu0 0.0
    %435 = vmatpush1.msra.mxu0 0.0
    %436 = vmatprep.subr.mxu0 0.0
    %437 = vmatpush1.msra.mxu0 0.0
    %438 = vmatprep.subr.mxu0 0.0
    %439 = vmatpush1.msra.mxu0 0.0
    %440 = vmatprep.mubr.f32.mxu0 0.0
    %441 = vmatmul.mubr.f32.gmra.mrb[0].mxu0 %v374
    %v442 = vpop.f32.mrb[0].mxu0
    %v443 = vadd.f32 0.0, %v442
    %v444 = vpop.f32.mrb[0].mxu0
    %445 = vdwg.mxu0
    %v447 = vrot.slane %v443, 6
    %v449 = vadd.f32 %v158, %v447
    %v450 = vxor.u32 %v449, 2147483648
    %v451 = vmul.f32 %v450, 1.442695
    %v452 = vpow.pop %v451
    %v453 = vadd.f32 %v452, 1.0
    %v454 = vrcp.pop %v453
    %v455 = vmul.f32 1.0, %v454
    %v456 = vtanh.pop %v449
    %v458 = vrot.slane %v363, 7
    %v460 = vmul.f32 %v455, %v458
    %462 = vrot.lane.b32.xlu0 %v456, 32
    %v463 = vpop.permute.xlu0 %462
    %v465 = vmul.f32 %v455, %v463
    %467 = vrot.lane.b32.xlu0 %v465, 32
    %v468 = vpop.permute.xlu0 %467
    %v470 = vadd.f32 %v460, %v468
    %v471 = vtanh.pop %v470
    %473 = vrot.lane.b32.xlu0 %v471, 32
    %v474 = vpop.permute.xlu0 %473
    %v476 = vmul.f32 %v455, %v474
    %v478 = vrot.slane %v476, 2
    %479 = vrot.lane.b32.xlu0 %v478, 64
    %v480 = vpop.permute.xlu0 %479
    %v481 = vsel %vm165, %v480, 0
    %483 = vmatprep.subr.mxu0 0.0
    %484 = vmatpush1.msra.mxu0 %v161
    %485 = vmatprep.subr.mxu0 0.0
    %486 = vmatpush1.msra.mxu0 %v162
    %487 = vmatprep.subr.mxu0 0.0
    %488 = vmatpush1.msra.mxu0 %v163
    %489 = vmatprep.subr.mxu0 0.0
    %490 = vmatpush1.msra.mxu0 %v164
    %491 = vmatprep.subr.mxu0 0.0
    %492 = vmatpush1.msra.mxu0 0.0
    %493 = vmatprep.subr.mxu0 0.0
    %494 = vmatpush1.msra.mxu0 0.0
    %495 = vmatprep.subr.mxu0 0.0
    %496 = vmatpush1.msra.mxu0 0.0
    %497 = vmatprep.subr.mxu0 0.0
    %498 = vmatpush1.msra.mxu0 0.0
    %499 = vmatprep.subr.mxu0 0.0
    %500 = vmatpush1.msra.mxu0 0.0
    %501 = vmatprep.subr.mxu0 0.0
    %502 = vmatpush1.msra.mxu0 0.0
    %503 = vmatprep.subr.mxu0 0.0
    %504 = vmatpush1.msra.mxu0 0.0
    %505 = vmatprep.subr.mxu0 0.0
    %506 = vmatpush1.msra.mxu0 0.0
    %507 = vmatprep.subr.mxu0 0.0
    %508 = vmatpush1.msra.mxu0 0.0
    %509 = vmatprep.subr.mxu0 0.0
    %510 = vmatpush1.msra.mxu0 0.0
    %511 = vmatprep.subr.mxu0 0.0
    %512 = vmatpush1.msra.mxu0 0.0
    %513 = vmatprep.subr.mxu0 0.0
    %514 = vmatpush1.msra.mxu0 0.0
    %515 = vmatprep.subr.mxu0 0.0
    %516 = vmatpush1.msra.mxu0 0.0
    %517 = vmatprep.subr.mxu0 0.0
    %518 = vmatpush1.msra.mxu0 0.0
    %519 = vmatprep.subr.mxu0 0.0
    %520 = vmatpush1.msra.mxu0 0.0
    %521 = vmatprep.subr.mxu0 0.0
    %522 = vmatpush1.msra.mxu0 0.0
    %523 = vmatprep.subr.mxu0 0.0
    %524 = vmatpush1.msra.mxu0 0.0
    %525 = vmatprep.subr.mxu0 0.0
    %526 = vmatpush1.msra.mxu0 0.0
    %527 = vmatprep.subr.mxu0 0.0
    %528 = vmatpush1.msra.mxu0 0.0
    %529 = vmatprep.subr.mxu0 0.0
    %530 = vmatpush1.msra.mxu0 0.0
    %531 = vmatprep.subr.mxu0 0.0
    %532 = vmatpush1.msra.mxu0 0.0
    %533 = vmatprep.subr.mxu0 0.0
    %534 = vmatpush1.msra.mxu0 0.0
    %535 = vmatprep.subr.mxu0 0.0
    %536 = vmatpush1.msra.mxu0 0.0
    %537 = vmatprep.subr.mxu0 0.0
    %538 = vmatpush1.msra.mxu0 0.0
    %539 = vmatprep.subr.mxu0 0.0
    %540 = vmatpush1.msra.mxu0 0.0
    %541 = vmatprep.subr.mxu0 0.0
    %542 = vmatpush1.msra.mxu0 0.0
    %543 = vmatprep.subr.mxu0 0.0
    %544 = vmatpush1.msra.mxu0 0.0
    %545 = vmatprep.subr.mxu0 0.0
    %546 = vmatpush1.msra.mxu0 0.0
    %547 = vmatprep.mubr.f32.mxu0 0.0
    %548 = vmatmul.mubr.f32.gmra.mrb[0].mxu0 %v481
    %v549 = vpop.f32.mrb[0].mxu0
    %v550 = vadd.f32 0.0, %v549
    %v551 = vpop.f32.mrb[0].mxu0
    %552 = vdwg.mxu0
    %v554 = vrot.slane %v550, 5
    %v556 = vadd.f32 %v158, %v554
    %v557 = vxor.u32 %v556, 2147483648
    %v558 = vmul.f32 %v557, 1.442695
    %v559 = vpow.pop %v558
    %v560 = vadd.f32 %v559, 1.0
    %v561 = vrcp.pop %v560
    %v562 = vmul.f32 1.0, %v561
    %v563 = vtanh.pop %v556
    %v565 = vrot.slane %v470, 7
    %v567 = vmul.f32 %v562, %v565
    %569 = vrot.lane.b32.xlu0 %v563, 32
    %v570 = vpop.permute.xlu0 %569
    %v572 = vmul.f32 %v562, %v570
    %574 = vrot.lane.b32.xlu0 %v572, 32
    %v575 = vpop.permute.xlu0 %574
    %v577 = vadd.f32 %v567, %v575
    %v578 = vtanh.pop %v577
    %580 = vrot.lane.b32.xlu0 %v578, 32
    %v581 = vpop.permute.xlu0 %580
    %v583 = vmul.f32 %v562, %v581
    %v585 = vrot.slane %v583, 3
    %586 = vrot.lane.b32.xlu0 %v585, 64
    %v587 = vpop.permute.xlu0 %586
    %v588 = vsel %vm165, %v587, 0
    %590 = vmatprep.subr.mxu0 0.0
    %591 = vmatpush1.msra.mxu0 %v161
    %592 = vmatprep.subr.mxu0 0.0
    %593 = vmatpush1.msra.mxu0 %v162
    %594 = vmatprep.subr.mxu0 0.0
    %595 = vmatpush1.msra.mxu0 %v163
    %596 = vmatprep.subr.mxu0 0.0
    %597 = vmatpush1.msra.mxu0 %v164
    %598 = vmatprep.subr.mxu0 0.0
    %599 = vmatpush1.msra.mxu0 0.0
    %600 = vmatprep.subr.mxu0 0.0
    %601 = vmatpush1.msra.mxu0 0.0
    %602 = vmatprep.subr.mxu0 0.0
    %603 = vmatpush1.msra.mxu0 0.0
    %604 = vmatprep.subr.mxu0 0.0
    %605 = vmatpush1.msra.mxu0 0.0
    %606 = vmatprep.subr.mxu0 0.0
    %607 = vmatpush1.msra.mxu0 0.0
    %608 = vmatprep.subr.mxu0 0.0
    %609 = vmatpush1.msra.mxu0 0.0
    %610 = vmatprep.subr.mxu0 0.0
    %611 = vmatpush1.msra.mxu0 0.0
    %612 = vmatprep.subr.mxu0 0.0
    %613 = vmatpush1.msra.mxu0 0.0
    %614 = vmatprep.subr.mxu0 0.0
    %615 = vmatpush1.msra.mxu0 0.0
    %616 = vmatprep.subr.mxu0 0.0
    %617 = vmatpush1.msra.mxu0 0.0
    %618 = vmatprep.subr.mxu0 0.0
    %619 = vmatpush1.msra.mxu0 0.0
    %620 = vmatprep.subr.mxu0 0.0
    %621 = vmatpush1.msra.mxu0 0.0
    %622 = vmatprep.subr.mxu0 0.0
    %623 = vmatpush1.msra.mxu0 0.0
    %624 = vmatprep.subr.mxu0 0.0
    %625 = vmatpush1.msra.mxu0 0.0
    %626 = vmatprep.subr.mxu0 0.0
    %627 = vmatpush1.msra.mxu0 0.0
    %628 = vmatprep.subr.mxu0 0.0
    %629 = vmatpush1.msra.mxu0 0.0
    %630 = vmatprep.subr.mxu0 0.0
    %631 = vmatpush1.msra.mxu0 0.0
    %632 = vmatprep.subr.mxu0 0.0
    %633 = vmatpush1.msra.mxu0 0.0
    %634 = vmatprep.subr.mxu0 0.0
    %635 = vmatpush1.msra.mxu0 0.0
    %636 = vmatprep.subr.mxu0 0.0
    %637 = vmatpush1.msra.mxu0 0.0
    %638 = vmatprep.subr.mxu0 0.0
    %639 = vmatpush1.msra.mxu0 0.0
    %640 = vmatprep.subr.mxu0 0.0
    %641 = vmatpush1.msra.mxu0 0.0
    %642 = vmatprep.subr.mxu0 0.0
    %643 = vmatpush1.msra.mxu0 0.0
    %644 = vmatprep.subr.mxu0 0.0
    %645 = vmatpush1.msra.mxu0 0.0
    %646 = vmatprep.subr.mxu0 0.0
    %647 = vmatpush1.msra.mxu0 0.0
    %648 = vmatprep.subr.mxu0 0.0
    %649 = vmatpush1.msra.mxu0 0.0
    %650 = vmatprep.subr.mxu0 0.0
    %651 = vmatpush1.msra.mxu0 0.0
    %652 = vmatprep.subr.mxu0 0.0
    %653 = vmatpush1.msra.mxu0 0.0
    %654 = vmatprep.mubr.f32.mxu0 0.0
    %655 = vmatmul.mubr.f32.gmra.mrb[0].mxu0 %v588
    %v656 = vpop.f32.mrb[0].mxu0
    %v657 = vadd.f32 0.0, %v656
    %v658 = vpop.f32.mrb[0].mxu0
    %659 = vdwg.mxu0
    %v661 = vrot.slane %v657, 4
    %v663 = vadd.f32 %v158, %v661
    %v664 = vxor.u32 %v663, 2147483648
    %v665 = vmul.f32 %v664, 1.442695
    %v666 = vpow.pop %v665
    %v667 = vadd.f32 %v666, 1.0
    %v668 = vrcp.pop %v667
    %v669 = vmul.f32 1.0, %v668
    %v670 = vtanh.pop %v663
    %v672 = vrot.slane %v577, 7
    %v674 = vmul.f32 %v669, %v672
    %676 = vrot.lane.b32.xlu0 %v670, 32
    %v677 = vpop.permute.xlu0 %676
    %v679 = vmul.f32 %v669, %v677
    %681 = vrot.lane.b32.xlu0 %v679, 32
    %v682 = vpop.permute.xlu0 %681
    %v684 = vadd.f32 %v674, %v682
    %v685 = vtanh.pop %v684
    %687 = vrot.lane.b32.xlu0 %v685, 32
    %v688 = vpop.permute.xlu0 %687
    %v690 = vmul.f32 %v669, %v688
    %v692 = vrot.slane %v690, 4
    %693 = vrot.lane.b32.xlu0 %v692, 64
    %v694 = vpop.permute.xlu0 %693
    %v695 = vsel %vm165, %v694, 0
    %697 = vmatprep.subr.mxu0 0.0
    %698 = vmatpush1.msra.mxu0 %v161
    %699 = vmatprep.subr.mxu0 0.0
    %700 = vmatpush1.msra.mxu0 %v162
    %701 = vmatprep.subr.mxu0 0.0
    %702 = vmatpush1.msra.mxu0 %v163
    %703 = vmatprep.subr.mxu0 0.0
    %704 = vmatpush1.msra.mxu0 %v164
    %705 = vmatprep.subr.mxu0 0.0
    %706 = vmatpush1.msra.mxu0 0.0
    %707 = vmatprep.subr.mxu0 0.0
    %708 = vmatpush1.msra.mxu0 0.0
    %709 = vmatprep.subr.mxu0 0.0
    %710 = vmatpush1.msra.mxu0 0.0
    %711 = vmatprep.subr.mxu0 0.0
    %712 = vmatpush1.msra.mxu0 0.0
    %713 = vmatprep.subr.mxu0 0.0
    %714 = vmatpush1.msra.mxu0 0.0
    %715 = vmatprep.subr.mxu0 0.0
    %716 = vmatpush1.msra.mxu0 0.0
    %717 = vmatprep.subr.mxu0 0.0
    %718 = vmatpush1.msra.mxu0 0.0
    %719 = vmatprep.subr.mxu0 0.0
    %720 = vmatpush1.msra.mxu0 0.0
    %721 = vmatprep.subr.mxu0 0.0
    %722 = vmatpush1.msra.mxu0 0.0
    %723 = vmatprep.subr.mxu0 0.0
    %724 = vmatpush1.msra.mxu0 0.0
    %725 = vmatprep.subr.mxu0 0.0
    %726 = vmatpush1.msra.mxu0 0.0
    %727 = vmatprep.subr.mxu0 0.0
    %728 = vmatpush1.msra.mxu0 0.0
    %729 = vmatprep.subr.mxu0 0.0
    %730 = vmatpush1.msra.mxu0 0.0
    %731 = vmatprep.subr.mxu0 0.0
    %732 = vmatpush1.msra.mxu0 0.0
    %733 = vmatprep.subr.mxu0 0.0
    %734 = vmatpush1.msra.mxu0 0.0
    %735 = vmatprep.subr.mxu0 0.0
    %736 = vmatpush1.msra.mxu0 0.0
    %737 = vmatprep.subr.mxu0 0.0
    %738 = vmatpush1.msra.mxu0 0.0
    %739 = vmatprep.subr.mxu0 0.0
    %740 = vmatpush1.msra.mxu0 0.0
    %741 = vmatprep.subr.mxu0 0.0
    %742 = vmatpush1.msra.mxu0 0.0
    %743 = vmatprep.subr.mxu0 0.0
    %744 = vmatpush1.msra.mxu0 0.0
    %745 = vmatprep.subr.mxu0 0.0
    %746 = vmatpush1.msra.mxu0 0.0
    %747 = vmatprep.subr.mxu0 0.0
    %748 = vmatpush1.msra.mxu0 0.0
    %749 = vmatprep.subr.mxu0 0.0
    %750 = vmatpush1.msra.mxu0 0.0
    %751 = vmatprep.subr.mxu0 0.0
    %752 = vmatpush1.msra.mxu0 0.0
    %753 = vmatprep.subr.mxu0 0.0
    %754 = vmatpush1.msra.mxu0 0.0
    %755 = vmatprep.subr.mxu0 0.0
    %756 = vmatpush1.msra.mxu0 0.0
    %757 = vmatprep.subr.mxu0 0.0
    %758 = vmatpush1.msra.mxu0 0.0
    %759 = vmatprep.subr.mxu0 0.0
    %760 = vmatpush1.msra.mxu0 0.0
    %761 = vmatprep.mubr.f32.mxu0 0.0
    %762 = vmatmul.mubr.f32.gmra.mrb[0].mxu0 %v695
    %v763 = vpop.f32.mrb[0].mxu0
    %v764 = vadd.f32 0.0, %v763
    %v765 = vpop.f32.mrb[0].mxu0
    %766 = vdwg.mxu0
    %v768 = vrot.slane %v764, 3
    %v770 = vadd.f32 %v158, %v768
    %v771 = vxor.u32 %v770, 2147483648
    %v772 = vmul.f32 %v771, 1.442695
    %v773 = vpow.pop %v772
    %v774 = vadd.f32 %v773, 1.0
    %v775 = vrcp.pop %v774
    %v776 = vmul.f32 1.0, %v775
    %v777 = vtanh.pop %v770
    %v779 = vrot.slane %v684, 7
    %v781 = vmul.f32 %v776, %v779
    %783 = vrot.lane.b32.xlu0 %v777, 32
    %v784 = vpop.permute.xlu0 %783
    %v786 = vmul.f32 %v776, %v784
    %788 = vrot.lane.b32.xlu0 %v786, 32
    %v789 = vpop.permute.xlu0 %788
    %v791 = vadd.f32 %v781, %v789
    %v792 = vtanh.pop %v791
    %794 = vrot.lane.b32.xlu0 %v792, 32
    %v795 = vpop.permute.xlu0 %794
    %v797 = vmul.f32 %v776, %v795
    %v799 = vrot.slane %v797, 5
    %800 = vrot.lane.b32.xlu0 %v799, 64
    %v801 = vpop.permute.xlu0 %800
    %v802 = vsel %vm165, %v801, 0
    %804 = vmatprep.subr.mxu0 0.0
    %805 = vmatpush1.msra.mxu0 %v161
    %806 = vmatprep.subr.mxu0 0.0
    %807 = vmatpush1.msra.mxu0 %v162
    %808 = vmatprep.subr.mxu0 0.0
    %809 = vmatpush1.msra.mxu0 %v163
    %810 = vmatprep.subr.mxu0 0.0
    %811 = vmatpush1.msra.mxu0 %v164
    %812 = vmatprep.subr.mxu0 0.0
    %813 = vmatpush1.msra.mxu0 0.0
    %814 = vmatprep.subr.mxu0 0.0
    %815 = vmatpush1.msra.mxu0 0.0
    %816 = vmatprep.subr.mxu0 0.0
    %817 = vmatpush1.msra.mxu0 0.0
    %818 = vmatprep.subr.mxu0 0.0
    %819 = vmatpush1.msra.mxu0 0.0
    %820 = vmatprep.subr.mxu0 0.0
    %821 = vmatpush1.msra.mxu0 0.0
    %822 = vmatprep.subr.mxu0 0.0
    %823 = vmatpush1.msra.mxu0 0.0
    %824 = vmatprep.subr.mxu0 0.0
    %825 = vmatpush1.msra.mxu0 0.0
    %826 = vmatprep.subr.mxu0 0.0
    %827 = vmatpush1.msra.mxu0 0.0
    %828 = vmatprep.subr.mxu0 0.0
    %829 = vmatpush1.msra.mxu0 0.0
    %830 = vmatprep.subr.mxu0 0.0
    %831 = vmatpush1.msra.mxu0 0.0
    %832 = vmatprep.subr.mxu0 0.0
    %833 = vmatpush1.msra.mxu0 0.0
    %834 = vmatprep.subr.mxu0 0.0
    %835 = vmatpush1.msra.mxu0 0.0
    %836 = vmatprep.subr.mxu0 0.0
    %837 = vmatpush1.msra.mxu0 0.0
    %838 = vmatprep.subr.mxu0 0.0
    %839 = vmatpush1.msra.mxu0 0.0
    %840 = vmatprep.subr.mxu0 0.0
    %841 = vmatpush1.msra.mxu0 0.0
    %842 = vmatprep.subr.mxu0 0.0
    %843 = vmatpush1.msra.mxu0 0.0
    %844 = vmatprep.subr.mxu0 0.0
    %845 = vmatpush1.msra.mxu0 0.0
    %846 = vmatprep.subr.mxu0 0.0
    %847 = vmatpush1.msra.mxu0 0.0
    %848 = vmatprep.subr.mxu0 0.0
    %849 = vmatpush1.msra.mxu0 0.0
    %850 = vmatprep.subr.mxu0 0.0
    %851 = vmatpush1.msra.mxu0 0.0
    %852 = vmatprep.subr.mxu0 0.0
    %853 = vmatpush1.msra.mxu0 0.0
    %854 = vmatprep.subr.mxu0 0.0
    %855 = vmatpush1.msra.mxu0 0.0
    %856 = vmatprep.subr.mxu0 0.0
    %857 = vmatpush1.msra.mxu0 0.0
    %858 = vmatprep.subr.mxu0 0.0
    %859 = vmatpush1.msra.mxu0 0.0
    %860 = vmatprep.subr.mxu0 0.0
    %861 = vmatpush1.msra.mxu0 0.0
    %862 = vmatprep.subr.mxu0 0.0
    %863 = vmatpush1.msra.mxu0 0.0
    %864 = vmatprep.subr.mxu0 0.0
    %865 = vmatpush1.msra.mxu0 0.0
    %866 = vmatprep.subr.mxu0 0.0
    %867 = vmatpush1.msra.mxu0 0.0
    %868 = vmatprep.mubr.f32.mxu0 0.0
    %869 = vmatmul.mubr.f32.gmra.mrb[0].mxu0 %v802
    %v870 = vpop.f32.mrb[0].mxu0
    %v871 = vadd.f32 0.0, %v870
    %v872 = vpop.f32.mrb[0].mxu0
    %873 = vdwg.mxu0
    %v875 = vrot.slane %v871, 2
    %v877 = vadd.f32 %v158, %v875
    %v878 = vxor.u32 %v877, 2147483648
    %v879 = vmul.f32 %v878, 1.442695
    %v880 = vpow.pop %v879
    %v881 = vadd.f32 %v880, 1.0
    %v882 = vrcp.pop %v881
    %v883 = vmul.f32 1.0, %v882
    %v884 = vtanh.pop %v877
    %v886 = vrot.slane %v791, 7
    %v888 = vmul.f32 %v883, %v886
    %890 = vrot.lane.b32.xlu0 %v884, 32
    %v891 = vpop.permute.xlu0 %890
    %v893 = vmul.f32 %v883, %v891
    %895 = vrot.lane.b32.xlu0 %v893, 32
    %v896 = vpop.permute.xlu0 %895
    %v898 = vadd.f32 %v888, %v896
    %v899 = vtanh.pop %v898
    %901 = vrot.lane.b32.xlu0 %v899, 32
    %v902 = vpop.permute.xlu0 %901
    %v904 = vmul.f32 %v883, %v902
    %v906 = vrot.slane %v904, 6
    %907 = vrot.lane.b32.xlu0 %v906, 64
    %v908 = vpop.permute.xlu0 %907
    %v909 = vsel %vm165, %v908, 0
    %911 = vmatprep.subr.mxu0 0.0
    %912 = vmatpush1.msra.mxu0 %v161
    %913 = vmatprep.subr.mxu0 0.0
    %914 = vmatpush1.msra.mxu0 %v162
    %915 = vmatprep.subr.mxu0 0.0
    %916 = vmatpush1.msra.mxu0 %v163
    %917 = vmatprep.subr.mxu0 0.0
    %918 = vmatpush1.msra.mxu0 %v164
    %919 = vmatprep.subr.mxu0 0.0
    %920 = vmatpush1.msra.mxu0 0.0
    %921 = vmatprep.subr.mxu0 0.0
    %922 = vmatpush1.msra.mxu0 0.0
    %923 = vmatprep.subr.mxu0 0.0
    %924 = vmatpush1.msra.mxu0 0.0
    %925 = vmatprep.subr.mxu0 0.0
    %926 = vmatpush1.msra.mxu0 0.0
    %927 = vmatprep.subr.mxu0 0.0
    %928 = vmatpush1.msra.mxu0 0.0
    %929 = vmatprep.subr.mxu0 0.0
    %930 = vmatpush1.msra.mxu0 0.0
    %931 = vmatprep.subr.mxu0 0.0
    %932 = vmatpush1.msra.mxu0 0.0
    %933 = vmatprep.subr.mxu0 0.0
    %934 = vmatpush1.msra.mxu0 0.0
    %935 = vmatprep.subr.mxu0 0.0
    %936 = vmatpush1.msra.mxu0 0.0
    %937 = vmatprep.subr.mxu0 0.0
    %938 = vmatpush1.msra.mxu0 0.0
    %939 = vmatprep.subr.mxu0 0.0
    %940 = vmatpush1.msra.mxu0 0.0
    %941 = vmatprep.subr.mxu0 0.0
    %942 = vmatpush1.msra.mxu0 0.0
    %943 = vmatprep.subr.mxu0 0.0
    %944 = vmatpush1.msra.mxu0 0.0
    %945 = vmatprep.subr.mxu0 0.0
    %946 = vmatpush1.msra.mxu0 0.0
    %947 = vmatprep.subr.mxu0 0.0
    %948 = vmatpush1.msra.mxu0 0.0
    %949 = vmatprep.subr.mxu0 0.0
    %950 = vmatpush1.msra.mxu0 0.0
    %951 = vmatprep.subr.mxu0 0.0
    %952 = vmatpush1.msra.mxu0 0.0
    %953 = vmatprep.subr.mxu0 0.0
    %954 = vmatpush1.msra.mxu0 0.0
    %955 = vmatprep.subr.mxu0 0.0
    %956 = vmatpush1.msra.mxu0 0.0
    %957 = vmatprep.subr.mxu0 0.0
    %958 = vmatpush1.msra.mxu0 0.0
    %959 = vmatprep.subr.mxu0 0.0
    %960 = vmatpush1.msra.mxu0 0.0
    %961 = vmatprep.subr.mxu0 0.0
    %962 = vmatpush1.msra.mxu0 0.0
    %963 = vmatprep.subr.mxu0 0.0
    %964 = vmatpush1.msra.mxu0 0.0
    %965 = vmatprep.subr.mxu0 0.0
    %966 = vmatpush1.msra.mxu0 0.0
    %967 = vmatprep.subr.mxu0 0.0
    %968 = vmatpush1.msra.mxu0 0.0
    %969 = vmatprep.subr.mxu0 0.0
    %970 = vmatpush1.msra.mxu0 0.0
    %971 = vmatprep.subr.mxu0 0.0
    %972 = vmatpush1.msra.mxu0 0.0
    %973 = vmatprep.subr.mxu0 0.0
    %974 = vmatpush1.msra.mxu0 0.0
    %975 = vmatprep.mubr.f32.mxu0 0.0
    %976 = vmatmul.mubr.f32.gmra.mrb[0].mxu0 %v909
    %v977 = vpop.f32.mrb[0].mxu0
    %v978 = vadd.f32 0.0, %v977
    %v979 = vpop.f32.mrb[0].mxu0
    %980 = vdwg.mxu0
    %v982 = vrot.slane %v978, 1
    %v984 = vadd.f32 %v158, %v982
    %v985 = vxor.u32 %v984, 2147483648
    %v986 = vmul.f32 %v985, 1.442695
    %v987 = vpow.pop %v986
    %v988 = vadd.f32 %v987, 1.0
    %v989 = vrcp.pop %v988
    %v990 = vmul.f32 1.0, %v989
    %v991 = vtanh.pop %v984
    %v993 = vrot.slane %v898, 7
    %v995 = vmul.f32 %v990, %v993
    %997 = vrot.lane.b32.xlu0 %v991, 32
    %v998 = vpop.permute.xlu0 %997
    %v1000 = vmul.f32 %v990, %v998
    %1002 = vrot.lane.b32.xlu0 %v1000, 32
    %v1003 = vpop.permute.xlu0 %1002
    %v1005 = vadd.f32 %v995, %v1003
    %v1006 = vtanh.pop %v1005
    %1008 = vrot.lane.b32.xlu0 %v1006, 32
    %v1009 = vpop.permute.xlu0 %1008
    %v1011 = vmul.f32 %v990, %v1009
    %vm1012 = vcmask 1040384
    %v1013 = vsel %vm1012, %v263, %v369
    %vm1014 = vcmask 1041408
    %v1015 = vsel %vm1014, %v1013, %v476
    %vm1016 = vcmask 1042432
    %v1017 = vsel %vm1016, %v1015, %v583
    %vm1018 = vcmask 1043456
    %v1019 = vsel %vm1018, %v1017, %v690
    %vm1020 = vcmask 1044480
    %v1021 = vsel %vm1020, %v1019, %v797
    %vm1022 = vcmask 1045504
    %v1023 = vsel %vm1022, %v1021, %v904
    %vm1024 = vcmask 1046528
    %v1025 = vsel %vm1024, %v1023, %v1011
    %v1026 = vld [vmem:[#allocation8] sm:$0xff]
    %v1027 = vld [vmem:[#allocation8 + $0x8] sm:$0xff]
    %v1028 = vld [vmem:[#allocation8 + $0x10] sm:$0xff]
    %v1029 = vld [vmem:[#allocation8 + $0x18] sm:$0xff]
    %v1030 = vld [vmem:[%s5] sm:$0x1]
    %v1032 = vlaneseq
    %v1033 = vshrl.u32 %v1032, 7
    %v1034 = vsub.s32 0, %v1033
    %v1035 = vrot.slane %v1030, %v1034
    %1038 = vrot.lane.b32.xlu0 %v1025, 64
    %v1039 = vpop.permute.xlu0 %1038
    %v1040 = vsel %vm165, %v1039, 0
    %1042 = vmatprep.subr.mxu0 0.0
    %1043 = vmatpush1.msra.mxu0 %v1026
    %1044 = vmatprep.subr.mxu0 0.0
    %1045 = vmatpush1.msra.mxu0 %v1027
    %1046 = vmatprep.subr.mxu0 0.0
    %1047 = vmatpush1.msra.mxu0 %v1028
    %1048 = vmatprep.subr.mxu0 0.0
    %1049 = vmatpush1.msra.mxu0 %v1029
    %1050 = vmatprep.subr.mxu0 0.0
    %1051 = vmatpush1.msra.mxu0 0.0
    %1052 = vmatprep.subr.mxu0 0.0
    %1053 = vmatpush1.msra.mxu0 0.0
    %1054 = vmatprep.subr.mxu0 0.0
    %1055 = vmatpush1.msra.mxu0 0.0
    %1056 = vmatprep.subr.mxu0 0.0
    %1057 = vmatpush1.msra.mxu0 0.0
    %1058 = vmatprep.subr.mxu0 0.0
    %1059 = vmatpush1.msra.mxu0 0.0
    %1060 = vmatprep.subr.mxu0 0.0
    %1061 = vmatpush1.msra.mxu0 0.0
    %1062 = vmatprep.subr.mxu0 0.0
    %1063 = vmatpush1.msra.mxu0 0.0
    %1064 = vmatprep.subr.mxu0 0.0
    %1065 = vmatpush1.msra.mxu0 0.0
    %1066 = vmatprep.subr.mxu0 0.0
    %1067 = vmatpush1.msra.mxu0 0.0
    %1068 = vmatprep.subr.mxu0 0.0
    %1069 = vmatpush1.msra.mxu0 0.0
    %1070 = vmatprep.subr.mxu0 0.0
    %1071 = vmatpush1.msra.mxu0 0.0
    %1072 = vmatprep.subr.mxu0 0.0
    %1073 = vmatpush1.msra.mxu0 0.0
    %1074 = vmatprep.subr.mxu0 0.0
    %1075 = vmatpush1.msra.mxu0 0.0
    %1076 = vmatprep.subr.mxu0 0.0
    %1077 = vmatpush1.msra.mxu0 0.0
    %1078 = vmatprep.subr.mxu0 0.0
    %1079 = vmatpush1.msra.mxu0 0.0
    %1080 = vmatprep.subr.mxu0 0.0
    %1081 = vmatpush1.msra.mxu0 0.0
    %1082 = vmatprep.subr.mxu0 0.0
    %1083 = vmatpush1.msra.mxu0 0.0
    %1084 = vmatprep.subr.mxu0 0.0
    %1085 = vmatpush1.msra.mxu0 0.0
    %1086 = vmatprep.subr.mxu0 0.0
    %1087 = vmatpush1.msra.mxu0 0.0
    %1088 = vmatprep.subr.mxu0 0.0
    %1089 = vmatpush1.msra.mxu0 0.0
    %1090 = vmatprep.subr.mxu0 0.0
    %1091 = vmatpush1.msra.mxu0 0.0
    %1092 = vmatprep.subr.mxu0 0.0
    %1093 = vmatpush1.msra.mxu0 0.0
    %1094 = vmatprep.subr.mxu0 0.0
    %1095 = vmatpush1.msra.mxu0 0.0
    %1096 = vmatprep.subr.mxu0 0.0
    %1097 = vmatpush1.msra.mxu0 0.0
    %1098 = vmatprep.subr.mxu0 0.0
    %1099 = vmatpush1.msra.mxu0 0.0
    %1100 = vmatprep.subr.mxu0 0.0
    %1101 = vmatpush1.msra.mxu0 0.0
    %1102 = vmatprep.subr.mxu0 0.0
    %1103 = vmatpush1.msra.mxu0 0.0
    %1104 = vmatprep.subr.mxu0 0.0
    %1105 = vmatpush1.msra.mxu0 0.0
    %1106 = vmatprep.mubr.f32.mxu0 0.0
    %1107 = vmatmul.mubr.f32.gmra.mrb[0].mxu0 %v1040
    %v1108 = vpop.f32.mrb[0].mxu0
    %v1109 = vadd.f32 %v1035, %v1108
    %v1110 = vpop.f32.mrb[0].mxu0
    %1111 = vdwg.mxu0
    %1112 = vst [vmem:[#allocation10] sm:$0xff] %v1109
    // Predicated region
    $region42: #{tpu_custom_call.1} parent=1 // pred_check
      _
    $region43: #{tpu_custom_call.1} parent=1 // pred_check_branch
      %1114 = sbr.rel (0) target = $region45
    $region44: #{tpu_custom_call.1} parent=1 // pred_region
      %s1116 = ssub.s32 128, 128
      %1117 = vsyncadd [#allocation4], %s1116
      %s1119 = sshll.u32 [#allocation10], 4
      %s1120 = int_to_ptr.vmem [resolvable:$true] %s1119
      %1122 = dma.vmem_to_hbm [thread:$0]  %s1120, 128, %s6, [#allocation4]
    $region45: #{tpu_custom_call.1} parent=1 // pred_fallthru
      _
    // Predicated region
    $region46: #{tpu_custom_call.1} parent=1 // pred_check
      _
    $region47: #{tpu_custom_call.1} parent=1 // pred_check_branch
      %1124 = sbr.rel (0) target = $region49
    $region48: #{tpu_custom_call.1} parent=1 // pred_region
      %1125 = dma.done [#allocation4], 128
    $region49: #{tpu_custom_call.1} parent=1 // pred_fallthru
      _
    %1126 = vsyncpa [#allocation3], 1
    %1127 = vsyncpa [#allocation6], 1
    %1128 = vsyncpa [#allocation9], 1
    %1129 = vsyncpa [#allocation4], 1

</llo_original>
